<compile_context>
chip_gen: v7x
topology: tpu7x:2x2x1
jax: 0.10.0
libtpu: 0.0.40
codegen_flags: <defaults>
</compile_context>

<pallas_src>
import math

import jax
import jax.numpy as jnp
from jax import lax
from jax.experimental import pallas as pl
from jax.experimental.pallas import tpu as pltpu


def _mymodel_kernel(a_ref, h_ref, p_ref, o_ref):
    # Per-grid-step views: one graph.
    A = a_ref[0]                                  # (N, N) f32
    H = h_ref[0]                                  # (N, F) f32
    F_feat = h_ref.shape[2]

    W = p_ref[0:F_feat, :]                        # (F, F)  GCN weight
    Wfc = p_ref[F_feat:F_feat + 1, :]             # (1, F)  Linear weight (torch layout)
    bias = p_ref[F_feat + 1:F_feat + 2, 0:1]      # (1, 1)  Linear bias

    # d_hat = rowsum(A + I) = rowsum(A) + 1   (no NxN eye construction).
    # d_hat >= 1 always, so rsqrt is safe even for isolated nodes.
    d_hat = jnp.sum(A, axis=1, keepdims=True) + 1.0     # (N, 1)
    d_inv_sqrt = lax.rsqrt(d_hat)                        # (N, 1), EUP

    # H @ W with K = F = 5: keep it off the (badly underutilized) MXU.
    # Unrolled rank-1 updates -> pure VPU broadcast multiply-adds.
    HW = H[:, 0:1] * W[0:1, :]                           # (N, F)
    for k in range(1, F_feat):
        HW = HW + H[:, k:k + 1] * W[k:k + 1, :]

    # D^{-1/2} (A + I) D^{-1/2} H W == d_is * (A @ Y + Y),  Y = d_is * HW.
    Y = d_inv_sqrt * HW                                  # (N, F)
    AY = jnp.dot(A, Y, preferred_element_type=jnp.float32) + Y   # MXU: (N,N)@(N,F)
    x = jnp.maximum(d_inv_sqrt * AY, 0.0)                # relu, (N, F)

    # Graph pooling (sum over nodes) + Linear(5, 1) fused into ONE reduction:
    #   out = sum_{n,k} x[n, k] * Wfc[0, k] + bias
    out = jnp.sum(x * Wfc, axis=(0, 1), keepdims=True) + bias     # (1, 1)
    o_ref[0] = out


def mymodel_forward(A, H, W_gcn, W_fc, b_fc):
    """Batched MyModel forward: A (B,N,N), H (B,N,F) -> (B,1).

    out[b] == MyModel().forward(A[b], H[b]) for the given parameters.
    """
    B, N, _ = A.shape
    F_feat = H.shape[2]

    # Pack the tiny parameters into a single VMEM tile (3 inputs instead of 5).
    params = jnp.zeros((F_feat + 2, F_feat), dtype=jnp.float32)
    params = params.at[0:F_feat, :].set(W_gcn.astype(jnp.float32))
    params = params.at[F_feat, :].set(W_fc[0].astype(jnp.float32))
    params = params.at[F_feat + 1, 0].set(b_fc.reshape(())[()].astype(jnp.float32))

    grid_spec = pltpu.PrefetchScalarGridSpec(
        num_scalar_prefetch=0,
        grid=(B,),
        in_specs=[
            pl.BlockSpec((1, N, N), lambda b: (b, 0, 0)),        # per-graph A
            pl.BlockSpec((1, N, F_feat), lambda b: (b, 0, 0)),   # per-graph H
            # Constant index_map -> revisited block: weights DMA'd once, not B times.
            pl.BlockSpec((F_feat + 2, F_feat), lambda b: (0, 0)),
        ],
        out_specs=pl.BlockSpec((1, 1, 1), lambda b: (b, 0, 0)),
    )

    cost = pl.CostEstimate(
        flops=B * (2 * N * N * F_feat          # A @ Y
                   + 2 * N * F_feat * F_feat   # H @ W rank-1 updates
                   + 6 * N * F_feat            # scalings / relu / pool / fc
                   + 2 * F_feat),
        transcendentals=B * N,                 # rsqrt per node
        bytes_accessed=4 * (B * N * N + B * N * F_feat
                            + (F_feat + 2) * F_feat + B),
    )

    out = pl.pallas_call(
        _mymodel_kernel,
        out_shape=jax.ShapeDtypeStruct((B, 1, 1), jnp.float32),
        grid_spec=grid_spec,
        compiler_params=pltpu.CompilerParams(
            dimension_semantics=("parallel",)),   # v7x: batch split across 2 TCs
        cost_estimate=cost,
    )(A, H, params)
    return out.reshape(B, 1)


def _reference_single(A, H, W_gcn, W_fc, b_fc):
    """Pure-JAX reference mirroring the PyTorch forward exactly (one graph)."""
    N = A.shape[0]
    A_hat = A + jnp.eye(N, dtype=A.dtype)
    d = jnp.sum(A_hat, axis=1)
    D_inv_sqrt = jnp.diag(d ** -0.5)
    A_norm = D_inv_sqrt @ A_hat @ D_inv_sqrt
    HW = H @ W_gcn
    x = jax.nn.relu(A_norm @ HW)
    pooled = jnp.sum(x, axis=0)
    return pooled @ W_fc[0, :] + b_fc[0, 0]


if __name__ == "__main__":
    key = jax.random.PRNGKey(0)
    k_a, k_h, k_w, k_fw, k_fb = jax.random.split(key, 5)

    B, N, F = 16, 8, 5  # 16 graphs, 8 nodes, 5 features (in = out = 5)

    # Deterministic synthetic adjacency: symmetric 0/1 matrices, zero diagonal.
    A_rand = jax.random.bernoulli(k_a, p=0.4, shape=(B, N, N)).astype(jnp.float32)
    A = jnp.clip(A_rand + jnp.transpose(A_rand, (0, 2, 1)), 0.0, 1.0)
    A = A * (1.0 - jnp.eye(N, dtype=jnp.float32))[None, :, :]

    # Node features.
    H = jax.random.normal(k_h, (B, N, F), dtype=jnp.float32)

    # GCN weight: uniform(-stdv, stdv), stdv = 1/sqrt(5)  (as in the module).
    stdv = 1.0 / math.sqrt(F)
    W_gcn = jax.random.uniform(k_w, (F, F), minval=-stdv, maxval=stdv,
                               dtype=jnp.float32)

    # Linear(5, 1): torch default init uniform(-1/sqrt(5), 1/sqrt(5)).
    bound = 1.0 / math.sqrt(F)
    W_fc = jax.random.uniform(k_fw, (1, F), minval=-bound, maxval=bound,
                              dtype=jnp.float32)   # torch layout (out, in)
    b_fc = jax.random.uniform(k_fb, (1, 1), minval=-bound, maxval=bound,
                              dtype=jnp.float32)

    out = jax.block_until_ready(mymodel_forward(A, H, W_gcn, W_fc, b_fc))
    assert out.shape == (B, 1), out.shape

    ref = jax.block_until_ready(
        jax.vmap(lambda a, h: _reference_single(a, h, W_gcn, W_fc, b_fc))(A, H))
    assert jnp.allclose(out[:, 0], ref, rtol=1e-5, atol=1e-5), (out[:, 0], ref)

    print("KERNEL_OK")
</pallas_src>

<mosaic_0001>
module attributes {stable_mosaic.version = 11 : i64} {
  func.func @_mymodel_kernel(%arg0: i32, %arg1: memref<1x8x8xf32, #tpu.memory_space<vmem>>, %arg2: memref<1x8x5xf32, #tpu.memory_space<vmem>>, %arg3: memref<7x5xf32, #tpu.memory_space<vmem>>, %arg4: memref<1x1x1xf32, #tpu.memory_space<vmem>>) attributes {dimension_semantics = [#tpu.dimension_semantics<parallel>], iteration_bounds = array<i64: 16>, scalar_prefetch = 0 : i64, scratch_operands = 0 : i64, tpu.core_type = #tpu.core_type<tc>, window_params = [{transform_indices = @transform_0, window_bounds = array<i64: 1, 8, 8>}, {transform_indices = @transform_1, window_bounds = array<i64: 1, 8, 5>}, {pipeline_mode = #tpu.pipeline_mode<synchronous>, transform_indices = @transform_2, window_bounds = array<i64: 7, 5>}, {transform_indices = @transform_3, window_bounds = array<i64: 1, 1, 1>}]} {
    %c0 = arith.constant 0 : index
    %c0_0 = arith.constant 0 : index
    %c0_1 = arith.constant 0 : index
    %0 = vector.load %arg1[%c0, %c0_0, %c0_1] : memref<1x8x8xf32, #tpu.memory_space<vmem>>, vector<1x8x8xf32>
    %1 = vector.shape_cast %0 : vector<1x8x8xf32> to vector<8x8xf32>
    %c0_2 = arith.constant 0 : index
    %c0_3 = arith.constant 0 : index
    %c0_4 = arith.constant 0 : index
    %2 = vector.load %arg2[%c0_2, %c0_3, %c0_4] : memref<1x8x5xf32, #tpu.memory_space<vmem>>, vector<1x8x5xf32>
    %3 = vector.shape_cast %2 : vector<1x8x5xf32> to vector<8x5xf32>
    %c0_5 = arith.constant 0 : index
    %c0_6 = arith.constant 0 : index
    %4 = vector.load %arg3[%c0_5, %c0_6] : memref<7x5xf32, #tpu.memory_space<vmem>>, vector<5x5xf32>
    %c5 = arith.constant 5 : index
    %c0_7 = arith.constant 0 : index
    %5 = vector.load %arg3[%c5, %c0_7] : memref<7x5xf32, #tpu.memory_space<vmem>>, vector<1x5xf32>
    %c6 = arith.constant 6 : index
    %c0_8 = arith.constant 0 : index
    %6 = vector.load %arg3[%c6, %c0_8] : memref<7x5xf32, #tpu.memory_space<vmem>>, vector<1x1xf32>
    %cst = arith.constant dense<0.000000e+00> : vector<8xf32>
    %7 = vector.multi_reduction <add>, %1, %cst [1] : vector<8x8xf32> to vector<8xf32>
    %8 = vector.shape_cast %7 : vector<8xf32> to vector<8x1xf32>
    %cst_9 = arith.constant 1.000000e+00 : f32
    %9 = vector.broadcast %cst_9 : f32 to vector<8x1xf32>
    %10 = arith.addf %8, %9 : vector<8x1xf32>
    %11 = math.rsqrt %10 : vector<8x1xf32>
    %12 = vector.extract_strided_slice %3 {offsets = [0, 0], sizes = [8, 1], strides = [1, 1]} : vector<8x5xf32> to vector<8x1xf32>
    %13 = vector.extract_strided_slice %4 {offsets = [0, 0], sizes = [1, 5], strides = [1, 1]} : vector<5x5xf32> to vector<1x5xf32>
    %14 = vector.broadcast %12 : vector<8x1xf32> to vector<8x5xf32>
    %15 = vector.broadcast %13 : vector<1x5xf32> to vector<8x5xf32>
    %16 = arith.mulf %14, %15 : vector<8x5xf32>
    %17 = vector.extract_strided_slice %3 {offsets = [0, 1], sizes = [8, 1], strides = [1, 1]} : vector<8x5xf32> to vector<8x1xf32>
    %18 = vector.extract_strided_slice %4 {offsets = [1, 0], sizes = [1, 5], strides = [1, 1]} : vector<5x5xf32> to vector<1x5xf32>
    %19 = vector.broadcast %17 : vector<8x1xf32> to vector<8x5xf32>
    %20 = vector.broadcast %18 : vector<1x5xf32> to vector<8x5xf32>
    %21 = arith.mulf %19, %20 : vector<8x5xf32>
    %22 = arith.addf %16, %21 : vector<8x5xf32>
    %23 = vector.extract_strided_slice %3 {offsets = [0, 2], sizes = [8, 1], strides = [1, 1]} : vector<8x5xf32> to vector<8x1xf32>
    %24 = vector.extract_strided_slice %4 {offsets = [2, 0], sizes = [1, 5], strides = [1, 1]} : vector<5x5xf32> to vector<1x5xf32>
    %25 = vector.broadcast %23 : vector<8x1xf32> to vector<8x5xf32>
    %26 = vector.broadcast %24 : vector<1x5xf32> to vector<8x5xf32>
    %27 = arith.mulf %25, %26 : vector<8x5xf32>
    %28 = arith.addf %22, %27 : vector<8x5xf32>
    %29 = vector.extract_strided_slice %3 {offsets = [0, 3], sizes = [8, 1], strides = [1, 1]} : vector<8x5xf32> to vector<8x1xf32>
    %30 = vector.extract_strided_slice %4 {offsets = [3, 0], sizes = [1, 5], strides = [1, 1]} : vector<5x5xf32> to vector<1x5xf32>
    %31 = vector.broadcast %29 : vector<8x1xf32> to vector<8x5xf32>
    %32 = vector.broadcast %30 : vector<1x5xf32> to vector<8x5xf32>
    %33 = arith.mulf %31, %32 : vector<8x5xf32>
    %34 = arith.addf %28, %33 : vector<8x5xf32>
    %35 = vector.extract_strided_slice %3 {offsets = [0, 4], sizes = [8, 1], strides = [1, 1]} : vector<8x5xf32> to vector<8x1xf32>
    %36 = vector.extract_strided_slice %4 {offsets = [4, 0], sizes = [1, 5], strides = [1, 1]} : vector<5x5xf32> to vector<1x5xf32>
    %37 = vector.broadcast %35 : vector<8x1xf32> to vector<8x5xf32>
    %38 = vector.broadcast %36 : vector<1x5xf32> to vector<8x5xf32>
    %39 = arith.mulf %37, %38 : vector<8x5xf32>
    %40 = arith.addf %34, %39 : vector<8x5xf32>
    %41 = vector.broadcast %11 : vector<8x1xf32> to vector<8x5xf32>
    %42 = arith.mulf %41, %40 : vector<8x5xf32>
    %cst_10 = arith.constant dense<0.000000e+00> : vector<8x5xf32>
    %43 = tpu.matmul %1, %42, %cst_10 {dimension_numbers = #tpu.dot_dimension_numbers<[1], [0], [0], [1], [0, 0, 1, 1], [], []>} : vector<8x8xf32>, vector<8x5xf32>, vector<8x5xf32> -> vector<8x5xf32>
    %44 = arith.addf %43, %42 : vector<8x5xf32>
    %45 = vector.broadcast %11 : vector<8x1xf32> to vector<8x5xf32>
    %46 = arith.mulf %45, %44 : vector<8x5xf32>
    %cst_11 = arith.constant 0.000000e+00 : f32
    %47 = vector.broadcast %cst_11 : f32 to vector<8x5xf32>
    %48 = arith.maximumf %46, %47 : vector<8x5xf32>
    %49 = vector.broadcast %5 : vector<1x5xf32> to vector<8x5xf32>
    %50 = arith.mulf %48, %49 : vector<8x5xf32>
    %51 = vector.shape_cast %50 : vector<8x5xf32> to vector<1x8x5xf32>
    %cst_12 = arith.constant dense<0.000000e+00> : vector<1xf32>
    %52 = vector.multi_reduction <add>, %51, %cst_12 [1, 2] : vector<1x8x5xf32> to vector<1xf32>
    %53 = vector.shape_cast %52 : vector<1xf32> to vector<1x1x1xf32>
    %54 = vector.extract %53[0, 0, 0] : f32 from vector<1x1x1xf32>
    %55 = vector.broadcast %54 : f32 to vector<1x1xf32>
    %56 = arith.addf %55, %6 : vector<1x1xf32>
    %c0_13 = arith.constant 0 : index
    %c0_14 = arith.constant 0 : index
    %c0_15 = arith.constant 0 : index
    %57 = vector.load %arg4[%c0_13, %c0_14, %c0_15] : memref<1x1x1xf32, #tpu.memory_space<vmem>>, vector<1x1x1xf32>
    %58 = vector.shape_cast %57 : vector<1x1x1xf32> to vector<1x1xf32>
    %59 = vector.shape_cast %56 : vector<1x1xf32> to vector<1x1x1xf32>
    tpu.vector_store %arg4[%c0_13, %c0_14, %c0_15], %59 {strides = array<i32>} : memref<1x1x1xf32, #tpu.memory_space<vmem>>, vector<1x1x1xf32>,
    return
  }
  func.func @transform_0(%arg0: i32) -> (i32, i32, i32) {
    %c0_i32 = arith.constant 0 : i32
    %c0_i32_0 = arith.constant 0 : i32
    %c0_i32_1 = arith.constant 0 : i32
    return %arg0, %c0_i32, %c0_i32_0 : i32, i32, i32
  }
  func.func @transform_1(%arg0: i32) -> (i32, i32, i32) {
    %c0_i32 = arith.constant 0 : i32
    %c0_i32_0 = arith.constant 0 : i32
    %c0_i32_1 = arith.constant 0 : i32
    return %arg0, %c0_i32, %c0_i32_0 : i32, i32, i32
  }
  func.func @transform_2(%arg0: i32) -> (i32, i32) {
    %c0_i32 = arith.constant 0 : i32
    %c0_i32_0 = arith.constant 0 : i32
    %c0_i32_1 = arith.constant 0 : i32
    return %c0_i32, %c0_i32_0 : i32, i32
  }
  func.func @transform_3(%arg0: i32) -> (i32, i32, i32) {
    %c0_i32 = arith.constant 0 : i32
    %c0_i32_0 = arith.constant 0 : i32
    %c0_i32_1 = arith.constant 0 : i32
    return %arg0, %c0_i32, %c0_i32_0 : i32, i32, i32
  }
}

</mosaic_0001>

<llo_original>
// kernel: tpu_custom_call.1
$region0: #{tpu_custom_call.1}
  #allocation0 [shape = 'u32[]', space=smem, size = 0x4, offset = 0x4, fixed_abs, tag = 'smem constant byte address 0x4 - core index']
  #allocation1 [shape = 'u32[144,128]{1,0:T(1,128)}', space=vmem, size = 0x12000, scoped, tag = 'internal scratch']
  %s0 = inlined_call_operand.vmem [shape: f32[16,8,8], index: 0, kind: input, shape index: {}]
  %s1 = inlined_call_operand.vmem [shape: f32[16,8,5], index: 1, kind: input, shape index: {}]
  %s2 = inlined_call_operand.vmem [shape: f32[7,5], index: 2, kind: input, shape index: {}]
  %s3 = inlined_call_operand.vmem [shape: f32[16,1,1], index: 3, kind: output, shape index: {}]
  %s4 = sld [smem:[#allocation0]]
  $region45: #{tpu_custom_call.1} parent=0
    _
  %s6 = ssub.s32 1, %s4
  %s7 = scalar_select 0, %s6, %s4
  loop: start=0, step=1, limit=18
  $region2: #{tpu_custom_call.1} parent=0 // loop_pre_header
    _
  $region3: #{tpu_custom_call.1} parent=0 // loop_header
    %s9 = sphi 0, %s13
    %p10 = scmp.ge.s32.totalorder %s9, 18
    %s19 = sphi 0, %s21
    %s22 = sphi 0, %s19
    %s23 = sphi 0, %s22
    %s39 = sphi 0, %s23
    %s45 = sphi 0, %s47
    %s48 = sphi 0, %s45
    %s49 = sphi 0, %s48
    %s65 = sphi 0, %s49
    %s69 = sphi 0, %s69
    %s71 = sphi 0, %s69
    %s72 = sphi 0, %s71
    %s86 = sphi 0, %s72
    %s92 = sphi 0, %s94
    %s95 = sphi 0, %s92
    %s96 = sphi 0, %s95
    %s112 = sphi 0, %s96
  $region4: #{tpu_custom_call.1} parent=0 // loop_header_branch
    %12 = sbr.rel (%p10) target = $region8
  $region5: #{tpu_custom_call.1} parent=0 // loop_body
    %s14 = ssub.s32 %s9, 1
    %s15 = ssub.s32 %s9, 2
    %s16 = sadd.s32 %s9, 1
    %s17 = ssub.s32 %s9, %s16
    %p18 = scmp.eq.s32.totalorder %s17, 0
    %s20 = sadd.s32 %s19, 1
    %s21 = scalar_select %p18, %s19, %s20
    %p24 = pneg %p18
    %p25 = scmp.eq.s32.totalorder %s9, 15
    %p26 = por %p24, %p25
    %p27 = scmp.ne.s32.totalorder %s19, %s22
    %p28 = scmp.eq.s32.totalorder %s9, 0
    %p29 = por %p27, %p28
    %p30 = scmp.ne.s32.totalorder %s19, %s22
    %p31 = scmp.eq.s32.totalorder %s14, 15
    %p32 = por %p30, %p31
    %p33 = scmp.ne.s32.totalorder %s22, %s23
    %p34 = scmp.eq.s32.totalorder %s14, 0
    %p35 = por %p33, %p34
    %p36 = scmp.ne.s32.totalorder %s22, %s23
    %p37 = scmp.eq.s32.totalorder %s15, 15
    %p38 = por %p36, %p37
    %p40 = scmp.ne.s32.totalorder %s23, %s39
    %p41 = scmp.eq.s32.totalorder %s15, 0
    %p42 = por %p40, %p41
    %s43 = ssub.s32 %s9, %s16
    %p44 = scmp.eq.s32.totalorder %s43, 0
    %s46 = sadd.s32 %s45, 1
    %s47 = scalar_select %p44, %s45, %s46
    %p50 = pneg %p44
    %p51 = scmp.eq.s32.totalorder %s9, 15
    %p52 = por %p50, %p51
    %p53 = scmp.ne.s32.totalorder %s45, %s48
    %p54 = scmp.eq.s32.totalorder %s9, 0
    %p55 = por %p53, %p54
    %p56 = scmp.ne.s32.totalorder %s45, %s48
    %p57 = scmp.eq.s32.totalorder %s14, 15
    %p58 = por %p56, %p57
    %p59 = scmp.ne.s32.totalorder %s48, %s49
    %p60 = scmp.eq.s32.totalorder %s14, 0
    %p61 = por %p59, %p60
    %p62 = scmp.ne.s32.totalorder %s48, %s49
    %p63 = scmp.eq.s32.totalorder %s15, 15
    %p64 = por %p62, %p63
    %p66 = scmp.ne.s32.totalorder %s49, %s65
    %p67 = scmp.eq.s32.totalorder %s15, 0
    %p68 = por %p66, %p67
    %s70 = sadd.s32 %s69, 1
    %p73 = scmp.eq.s32.totalorder %s9, 15
    %p74 = scmp.ne.s32.totalorder %s69, %s71
    %p75 = scmp.eq.s32.totalorder %s9, 0
    %p76 = por %p74, %p75
    %p77 = scmp.ne.s32.totalorder %s69, %s71
    %p78 = scmp.eq.s32.totalorder %s14, 15
    %p79 = por %p77, %p78
    %p80 = scmp.ne.s32.totalorder %s71, %s72
    %p81 = scmp.eq.s32.totalorder %s14, 0
    %p82 = por %p80, %p81
    %p83 = scmp.ne.s32.totalorder %s71, %s72
    %p84 = scmp.eq.s32.totalorder %s15, 15
    %p85 = por %p83, %p84
    %p87 = scmp.ne.s32.totalorder %s72, %s86
    %p88 = scmp.eq.s32.totalorder %s15, 0
    %p89 = por %p87, %p88
    %s90 = ssub.s32 %s9, %s16
    %p91 = scmp.eq.s32.totalorder %s90, 0
    %s93 = sadd.s32 %s92, 1
    %s94 = scalar_select %p91, %s92, %s93
    %p97 = pneg %p91
    %p98 = scmp.eq.s32.totalorder %s9, 15
    %p99 = por %p97, %p98
    %p100 = scmp.ne.s32.totalorder %s92, %s95
    %p101 = scmp.eq.s32.totalorder %s9, 0
    %p102 = por %p100, %p101
    %p103 = scmp.ne.s32.totalorder %s92, %s95
    %p104 = scmp.eq.s32.totalorder %s14, 15
    %p105 = por %p103, %p104
    %p106 = scmp.ne.s32.totalorder %s95, %s96
    %p107 = scmp.eq.s32.totalorder %s14, 0
    %p108 = por %p106, %p107
    %p109 = scmp.ne.s32.totalorder %s95, %s96
    %p110 = scmp.eq.s32.totalorder %s15, 15
    %p111 = por %p109, %p110
    %p113 = scmp.ne.s32.totalorder %s96, %s112
    %p114 = scmp.eq.s32.totalorder %s15, 0
    %p115 = por %p113, %p114
    %p116 = scmp.le.s32.totalorder 1, %s9
    %p117 = scmp.lt.s32.totalorder %s9, 17
    %p118 = pnand %p116, %p117
    %p119 = pneg %p118
    // Predicated region
    $region9: #{tpu_custom_call.1} parent=5 // pred_check
      _
    $region10: #{tpu_custom_call.1} parent=5 // pred_check_branch
      %121 = sbr.rel (%p118) target = $region12
    $region11: #{tpu_custom_call.1} parent=5 // pred_region
      %s122 = ssub.s32 %s9, 1
      // Predicated region
      $region13: #{tpu_custom_call.1} parent=11 // pred_check
        %p123 = pneg %p82
      $region14: #{tpu_custom_call.1} parent=11 // pred_check_branch
        %125 = sbr.rel (%p123) target = $region16
      $region15: #{tpu_custom_call.1} parent=11 // pred_region
        _
      $region16: #{tpu_custom_call.1} parent=11 // pred_fallthru
        _
    $region12: #{tpu_custom_call.1} parent=5 // pred_fallthru
      _
    %p126 = scmp.lt.s32.totalorder %s9, 16
    // Predicated region
    $region17: #{tpu_custom_call.1} parent=5 // pred_check
      %p127 = pneg %p126
    $region18: #{tpu_custom_call.1} parent=5 // pred_check_branch
      %129 = sbr.rel (%p127) target = $region20
    $region19: #{tpu_custom_call.1} parent=5 // pred_region
      // Predicated region
      $region21: #{tpu_custom_call.1} parent=19 // pred_check
        %p130 = pneg %p29
      $region22: #{tpu_custom_call.1} parent=19 // pred_check_branch
        %132 = sbr.rel (%p130) target = $region24
      $region23: #{tpu_custom_call.1} parent=19 // pred_region
        %p133 = scmp.lt.s32.totalorder %s9, 15
        %s134 = scalar_select %p133, %s9, 15
        %s135 = smul.addr %s134, 8
        %s136 = scalar_lea.vmem %s0, %s135
      $region24: #{tpu_custom_call.1} parent=19 // pred_fallthru
        _
      // Predicated region
      $region25: #{tpu_custom_call.1} parent=19 // pred_check
        %p137 = pneg %p55
      $region26: #{tpu_custom_call.1} parent=19 // pred_check_branch
        %139 = sbr.rel (%p137) target = $region28
      $region27: #{tpu_custom_call.1} parent=19 // pred_region
        %p140 = scmp.lt.s32.totalorder %s9, 15
        %s141 = scalar_select %p140, %s9, 15
        %s142 = smul.addr %s141, 8
        %s143 = scalar_lea.vmem %s1, %s142
      $region28: #{tpu_custom_call.1} parent=19 // pred_fallthru
        _
    $region20: #{tpu_custom_call.1} parent=5 // pred_fallthru
      _
    %p144 = scmp.le.s32.totalorder 1, %s9
    %p145 = scmp.lt.s32.totalorder %s9, 17
    %p146 = pnand %p144, %p145
    %p147 = pneg %p146
    // Predicated region
    $region29: #{tpu_custom_call.1} parent=5 // pred_check
      _
    $region30: #{tpu_custom_call.1} parent=5 // pred_check_branch
      %149 = sbr.rel (%p146) target = $region32
    $region31: #{tpu_custom_call.1} parent=5 // pred_region
      %s150 = ssub.s32 %s9, 1
      %p151 = scmp.lt.s32.totalorder %s14, 15
      %s152 = scalar_select %p151, %s14, 15
      %s153 = smul.addr %s152, 8
      %s154 = scalar_lea.vmem %s0, %s153
      %p155 = pneg %p35
      %p156 = pneg %p32
      %p157 = scmp.lt.s32.totalorder %s14, 15
      %s158 = scalar_select %p157, %s14, 15
      %s159 = smul.addr %s158, 8
      %s160 = scalar_lea.vmem %s1, %s159
      %p161 = pneg %p61
      %p162 = pneg %p58
      %p163 = pneg %p82
      %p164 = pneg %p79
      %p165 = pneg %p108
      %p166 = pneg %p105
      %p167 = scmp.lt.s32.totalorder %s14, 15
      %s168 = scalar_select %p167, %s14, 15
      %s169 = scalar_lea.vmem %s3, %s168
      %p170 = scmp.lt.s32.totalorder %s14, 15
      %s171 = scalar_select %p170, %s14, 15
      %s172 = smul.addr %s171, 8
      %s173 = scalar_lea.vmem %s0, %s172
      %p174 = scmp.lt.s32.totalorder %s14, 15
      %s175 = scalar_select %p174, %s14, 15
      %s176 = smul.addr %s175, 8
      %s177 = scalar_lea.vmem %s1, %s176
      %p178 = scmp.lt.s32.totalorder %s14, 15
      %s179 = scalar_select %p178, %s14, 15
      %s180 = scalar_lea.vmem %s3, %s179
      %v181 = vld [vmem:[%s173] sm:$0xff]
      %v182 = vld [vmem:[%s177] sm:$0xff]
      %v183 = vld [vmem:[%s2] sm:$0x1f]
      %v184 = vld [vmem:[%s2 + $0x5] sm:$0x1]
      %v185 = vld [vmem:[%s2 + $0x6] sm:$0x1]
      %vm186 = vcmask 64512
      %v187 = vsel %vm186, %v181, 0.0
      %188 = vadd.xlane.f32.xlu0 %v187
      %v189 = vpop.xlane.xlu0 %188
      %v190 = vadd.f32 %v189, 1.0
      %v191 = vrsqrt.pop %v190
      %193 = vset.pattern.permute.xlu0 0
      %194 = vperm.xlu0 %193, %v182
      %v195 = vpop.permute.xlu0 %194
      %v197 = vlaneseq
      %v198 = vshrl.u32 %v197, 7
      %v199 = vsub.s32 0, %v198
      %v200 = vrot.slane %v183, %v199
      %v201 = vmul.f32 %v195, %v200
      %202 = vset.pattern.permute.xlu0 1
      %203 = vperm.xlu0 %202, %v182
      %v204 = vpop.permute.xlu0 %203
      %v206 = vlaneseq
      %v207 = vshrl.u32 %v206, 7
      %v208 = vsub.s32 1, %v207
      %v209 = vrot.slane %v183, %v208
      %v210 = vmul.f32 %v204, %v209
      %v211 = vadd.f32 %v201, %v210
      %212 = vset.pattern.permute.xlu0 2
      %213 = vperm.xlu0 %212, %v182
      %v214 = vpop.permute.xlu0 %213
      %v216 = vlaneseq
      %v217 = vshrl.u32 %v216, 7
      %v218 = vsub.s32 2, %v217
      %v219 = vrot.slane %v183, %v218
      %v220 = vmul.f32 %v214, %v219
      %v221 = vadd.f32 %v211, %v220
      %222 = vset.pattern.permute.xlu0 3
      %223 = vperm.xlu0 %222, %v182
      %v224 = vpop.permute.xlu0 %223
      %v226 = vlaneseq
      %v227 = vshrl.u32 %v226, 7
      %v228 = vsub.s32 3, %v227
      %v229 = vrot.slane %v183, %v228
      %v230 = vmul.f32 %v224, %v229
      %v231 = vadd.f32 %v221, %v230
      %232 = vset.pattern.permute.xlu0 4
      %233 = vperm.xlu0 %232, %v182
      %v234 = vpop.permute.xlu0 %233
      %v236 = vlaneseq
      %v237 = vshrl.u32 %v236, 7
      %v238 = vsub.s32 4, %v237
      %v239 = vrot.slane %v183, %v238
      %v240 = vmul.f32 %v234, %v239
      %v241 = vadd.f32 %v231, %v240
      %v242 = vmul.f32 %v191, %v241
      %v244 = vsel %vm186, %v181, 0
      %246 = vmatprep.subr.mxu0 0.0
      %247 = vmatpush1.msra.mxu0 %v242
      %248 = vmatprep.subr.mxu0 0.0
      %249 = vmatpush1.msra.mxu0 0.0
      %250 = vmatprep.subr.mxu0 0.0
      %251 = vmatpush1.msra.mxu0 0.0
      %252 = vmatprep.subr.mxu0 0.0
      %253 = vmatpush1.msra.mxu0 0.0
      %254 = vmatprep.subr.mxu0 0.0
      %255 = vmatpush1.msra.mxu0 0.0
      %256 = vmatprep.subr.mxu0 0.0
      %257 = vmatpush1.msra.mxu0 0.0
      %258 = vmatprep.subr.mxu0 0.0
      %259 = vmatpush1.msra.mxu0 0.0
      %260 = vmatprep.subr.mxu0 0.0
      %261 = vmatpush1.msra.mxu0 0.0
      %262 = vmatprep.subr.mxu0 0.0
      %263 = vmatpush1.msra.mxu0 0.0
      %264 = vmatprep.subr.mxu0 0.0
      %265 = vmatpush1.msra.mxu0 0.0
      %266 = vmatprep.subr.mxu0 0.0
      %267 = vmatpush1.msra.mxu0 0.0
      %268 = vmatprep.subr.mxu0 0.0
      %269 = vmatpush1.msra.mxu0 0.0
      %270 = vmatprep.subr.mxu0 0.0
      %271 = vmatpush1.msra.mxu0 0.0
      %272 = vmatprep.subr.mxu0 0.0
      %273 = vmatpush1.msra.mxu0 0.0
      %274 = vmatprep.subr.mxu0 0.0
      %275 = vmatpush1.msra.mxu0 0.0
      %276 = vmatprep.subr.mxu0 0.0
      %277 = vmatpush1.msra.mxu0 0.0
      %278 = vmatprep.subr.mxu0 0.0
      %279 = vmatpush1.msra.mxu0 0.0
      %280 = vmatprep.subr.mxu0 0.0
      %281 = vmatpush1.msra.mxu0 0.0
      %282 = vmatprep.subr.mxu0 0.0
      %283 = vmatpush1.msra.mxu0 0.0
      %284 = vmatprep.subr.mxu0 0.0
      %285 = vmatpush1.msra.mxu0 0.0
      %286 = vmatprep.subr.mxu0 0.0
      %287 = vmatpush1.msra.mxu0 0.0
      %288 = vmatprep.subr.mxu0 0.0
      %289 = vmatpush1.msra.mxu0 0.0
      %290 = vmatprep.subr.mxu0 0.0
      %291 = vmatpush1.msra.mxu0 0.0
      %292 = vmatprep.subr.mxu0 0.0
      %293 = vmatpush1.msra.mxu0 0.0
      %294 = vmatprep.subr.mxu0 0.0
      %295 = vmatpush1.msra.mxu0 0.0
      %296 = vmatprep.subr.mxu0 0.0
      %297 = vmatpush1.msra.mxu0 0.0
      %298 = vmatprep.subr.mxu0 0.0
      %299 = vmatpush1.msra.mxu0 0.0
      %300 = vmatprep.subr.mxu0 0.0
      %301 = vmatpush1.msra.mxu0 0.0
      %302 = vmatprep.subr.mxu0 0.0
      %303 = vmatpush1.msra.mxu0 0.0
      %304 = vmatprep.subr.mxu0 0.0
      %305 = vmatpush1.msra.mxu0 0.0
      %306 = vmatprep.subr.mxu0 0.0
      %307 = vmatpush1.msra.mxu0 0.0
      %308 = vmatprep.subr.mxu0 0.0
      %309 = vmatpush1.msra.mxu0 0.0
      %310 = vmatprep.mubr.f32.mxu0 0.0
      %311 = vmatmul.mubr.f32.gmra.mrb[0].mxu0 %v244
      %v312 = vpop.f32.mrb[0].mxu0
      %v313 = vadd.f32 %v242, %v312
      %v314 = vpop.f32.mrb[0].mxu0
      %315 = vdwg.mxu0
      %v316 = vmul.f32 %v191, %v313
      %v317 = vmax.f32 %v316, 0.0
      %v318 = vlaneseq
      %v319 = vshrl.u32 %v318, 7
      %v320 = vsub.s32 0, %v319
      %v321 = vrot.slane %v184, %v320
      %v322 = vmul.f32 %v317, %v321
      %vm323 = vcmask 39936
      %v324 = vsel %vm323, %v322, 0.0
      %325 = vadd.xlane.f32.xlu0 %v324
      %v326 = vpop.xlane.xlu0 %325
      %v327 = vrot.slane %v326, 4
      %v328 = vadd.f32 %v326, %v327
      %v329 = vrot.slane %v328, 2
      %v330 = vadd.f32 %v328, %v329
      %v331 = vrot.slane %v330, 1
      %v332 = vadd.f32 %v330, %v331
      %s333 = vtos %v332
      %v334 = vstv %s333
      %v335 = vadd.f32 %v334, %v185
      %vm336 = vcmask 0
      %337 = vst.msk [vmem:[%s180] sm:$0x1] %vm336, %v335
      %p338 = scmp.lt.s32.totalorder %s14, 15
      %s339 = scalar_select %p338, %s14, 15
      %s340 = scalar_lea.vmem %s3, %s339
      // Predicated region
      $region33: #{tpu_custom_call.1} parent=31 // pred_check
        %p341 = pneg %p105
      $region34: #{tpu_custom_call.1} parent=31 // pred_check_branch
        %343 = sbr.rel (%p341) target = $region36
      $region35: #{tpu_custom_call.1} parent=31 // pred_region
        _
      $region36: #{tpu_custom_call.1} parent=31 // pred_fallthru
        _
    $region32: #{tpu_custom_call.1} parent=5 // pred_fallthru
      _
    %p344 = scmp.le.s32.totalorder 2, %s9
    // Predicated region
    $region37: #{tpu_custom_call.1} parent=5 // pred_check
      %p345 = pneg %p344
    $region38: #{tpu_custom_call.1} parent=5 // pred_check_branch
      %347 = sbr.rel (%p345) target = $region40
    $region39: #{tpu_custom_call.1} parent=5 // pred_region
      %s348 = ssub.s32 %s9, 2
      // Predicated region
      $region41: #{tpu_custom_call.1} parent=39 // pred_check
        %p349 = pneg %p111
      $region42: #{tpu_custom_call.1} parent=39 // pred_check_branch
        %351 = sbr.rel (%p349) target = $region44
      $region43: #{tpu_custom_call.1} parent=39 // pred_region
        %p352 = scmp.lt.s32.totalorder %s15, 15
        %s353 = scalar_select %p352, %s15, 15
        %s354 = scalar_lea.vmem %s3, %s353
      $region44: #{tpu_custom_call.1} parent=39 // pred_fallthru
        _
    $region40: #{tpu_custom_call.1} parent=5 // pred_fallthru
      _
  $region6: #{tpu_custom_call.1} parent=0 // loop_footer
    %s13 = sadd.s32 1, %s9
  $region7: #{tpu_custom_call.1} parent=0 // loop_footer_branch
    %8 = sbr.rel target = $region3
  $region8: #{tpu_custom_call.1} parent=0 // loop_exit
    _

</llo_original>
